<compile_context>
chip_gen: v7x
topology: tpu7x:2x2x1
jax: 0.10.0
libtpu: 0.0.40
codegen_flags: <defaults>
</compile_context>

<pallas_src>
import numpy as np
import jax
import jax.numpy as jnp
from jax.experimental import pallas as pl
from jax.experimental.pallas import tpu as pltpu

EPS = 1e-5  # nn.BatchNorm2d default
_VMEM = pl.BlockSpec(memory_space=pltpu.MemorySpace.VMEM)


# ---------------------------------------------------------------------------
# host-side precompute (static shapes only)
# ---------------------------------------------------------------------------
def _bilinear_matrix(in_size, out_size):
    """(out,in) 1-D interpolation matrix replicating PyTorch bilinear, align_corners=False."""
    mat = np.zeros((out_size, in_size), np.float32)
    scale = in_size / out_size
    for i in range(out_size):
        src = max((i + 0.5) * scale - 0.5, 0.0)
        i0 = min(int(np.floor(src)), in_size - 1)
        i1 = min(i0 + 1, in_size - 1)
        lam = src - i0
        mat[i, i0] += 1.0 - lam
        mat[i, i1] += lam
    return mat


def _probe_roll_matches_jnp():
    """Pin the pltpu.roll shift convention (expected: identical to jnp.roll).

    This is a trace-time check compiled once; with a pinned JAX version it can be
    replaced by a unit-tested constant.  The numeric self-check below would also catch
    a flipped convention."""
    def k(x_ref, o_ref):
        o_ref[...] = pltpu.roll(x_ref[...], shift=1, axis=1)

    x = jax.lax.broadcasted_iota(jnp.float32, (8, 128), 1)
    y = pl.pallas_call(
        k,
        out_shape=jax.ShapeDtypeStruct((8, 128), jnp.float32),
        in_specs=[_VMEM],
        out_specs=_VMEM,
    )(x)
    return bool(y[0, 1] == 0.0)  # jnp.roll(iota, 1)[1] == 0


# ---------------------------------------------------------------------------
# fused kernel
# ---------------------------------------------------------------------------
def _make_uslayer_kernel(n_img, cin, cout, ho, wo, roll_like_jnp):
    hwo = ho * wo
    m = n_img * hwo
    inv_m = 1.0 / m

    # static tap table: (weight index, dy, dx, lane shift) for the 3x3 convs
    taps = []
    for t in range(9):
        dy, dx = t // 3 - 1, t % 3 - 1
        off = dy * wo + dx                              # flat-index offset of tap t
        shift = ((-off) if roll_like_jnp else off) % m  # roll that brings act[p+off] to p
        taps.append((t, dy, dx, shift))

    def _bn_scale_shift(y, g, b):
        # two-pass training-mode BatchNorm stats (biased var), all in f32: no
        # E[x^2]-mean^2 cancellation.  Separable-ready: in a tiled kernel this becomes a
        # cross-tile (sum, centered-sumsq) reduction followed by this fold.
        mean = jnp.sum(y, axis=1, keepdims=True) * inv_m
        var = jnp.sum(jnp.square(y - mean), axis=1, keepdims=True) * inv_m
        scale = g * jax.lax.rsqrt(var + EPS)
        shift = b - mean * scale
        return scale, shift

    def _bn_relu(y, g, b):
        scale, shift = _bn_scale_shift(y, g, b)
        return jnp.maximum(y * scale + shift, 0.0)      # single fused VPU pass

    def kernel(x_ref, u_ref, w0_ref, w1_ref, w2_ref, w3_ref, w4_ref,
               g_ref, b_ref, o_ref, act0_ref):
        # ---- in-kernel tap validity masks (iota compares; VPU work under the MXU) ----
        pos = jax.lax.broadcasted_iota(jnp.int32, (1, m), 1)
        row = (pos // wo) % ho
        col = pos % wo
        valid = [((row + dy) >= 0) & ((row + dy) < ho) &
                 ((col + dx) >= 0) & ((col + dx) < wo)
                 for (_, dy, dx, _) in taps]

        def conv3x3(a_f32, w_ref):
            # 3x3 conv = 9 accumulating K=C matmuls; no patch matrix in VMEM.
            # (Wrapped lanes from the roll are always border taps -> masked to zero.)
            acc = jnp.zeros((cout, m), jnp.float32)
            for (t, _, _, shift), v in zip(taps, valid):
                tap = a_f32 if shift == 0 else pltpu.roll(a_f32, shift=shift, axis=1)
                tap = jnp.where(v, tap, 0.0).astype(jnp.bfloat16)
                acc = acc + jnp.dot(w_ref[t], tap, preferred_element_type=jnp.float32)
            return acc

        # ---- bilinear upsample: ONE matmul for all images & channels (bf16 -> f32) ----
        ups = jnp.dot(x_ref[...].astype(jnp.bfloat16), u_ref[...],
                      preferred_element_type=jnp.float32)          # (N*Cin, Ho*Wo)
        # scatter image slabs into the lane-dense (Cin, M) activation scratch (bf16)
        for n in range(n_img):
            act0_ref[:, n * hwo:(n + 1) * hwo] = (
                ups[n * cin:(n + 1) * cin, :].astype(jnp.bfloat16))
        act_bf = act0_ref[...]                                      # (Cin, M) bf16

        # ---- layer 0: 1x1 conv -> BN -> ReLU ----
        a = _bn_relu(jnp.dot(w0_ref[...], act_bf, preferred_element_type=jnp.float32),
                     g_ref[0], b_ref[0])
        # ---- layer 1: 3x3 conv -> BN -> ReLU ----
        a = _bn_relu(conv3x3(a, w1_ref), g_ref[1], b_ref[1])
        # ---- layer 2: 1x1 ----
        a = _bn_relu(jnp.dot(w2_ref[...], a.astype(jnp.bfloat16),
                             preferred_element_type=jnp.float32),
                     g_ref[2], b_ref[2])
        # ---- layer 3: 3x3 ----
        a = _bn_relu(conv3x3(a, w3_ref), g_ref[3], b_ref[3])
        # ---- layer 4: 1x1 ----
        a = _bn_relu(jnp.dot(w4_ref[...], a.astype(jnp.bfloat16),
                             preferred_element_type=jnp.float32),
                     g_ref[4], b_ref[4])

        # write back per image: lane-dense (Cout, Ho*Wo) slabs -> unmasked 1024-lane stores
        for n in range(n_img):
            o_ref[n] = a[:, n * hwo:(n + 1) * hwo]

    return kernel


# ---------------------------------------------------------------------------
# parameters + public forward
# ---------------------------------------------------------------------------
def init_params(key, in_channel, out_channel):
    """Synthetic init mirroring PyTorch defaults: conv W ~ U(+-1/sqrt(fan_in)), BN gamma=1, beta=0.
    Conv bias is omitted: training-mode BatchNorm subtracts the batch mean right after the
    conv, so a per-channel constant bias cancels exactly."""
    layers = []
    c_in = in_channel
    for ksz in (1, 3, 1, 3, 1):
        key, k_w = jax.random.split(key)
        fan_in = c_in * ksz * ksz
        bound = 1.0 / float(fan_in) ** 0.5
        w_hwio = jax.random.uniform(k_w, (ksz, ksz, c_in, out_channel),
                                    jnp.float32, -bound, bound)
        layers.append({
            "ksz": ksz,
            "w_hwio": w_hwio,                                 # HWIO, also used by reference
            "gamma": jnp.ones((out_channel,), jnp.float32),
            "beta": jnp.zeros((out_channel,), jnp.float32),
        })
        c_in = out_channel
    return layers


def make_uslayer_forward(layers, in_channel, out_channel, scale, n_img, h, w, roll_like_jnp):
    ho, wo = h * scale, w * scale
    hw, hwo, m = h * w, ho * wo, n_img * ho * wo

    # Dense bilinear operator built from the separable 1-D factors, stored in bf16
    # (~0.5 MiB here).  At production spatial sizes it must be streamed per output tile
    # or applied separably (see NOTE in the header); at this toy size keeping it resident
    # is the relayout-free, DMA-minimal choice.
    a_h = _bilinear_matrix(h, ho)                 # (Ho, H)
    b_w = _bilinear_matrix(w, wo)                 # (Wo, W)
    u_op = jnp.asarray(np.kron(a_h, b_w).T).astype(jnp.bfloat16)   # (H*W, Ho*Wo)

    # kernel-layout weights, bf16:
    #   1x1 -> (Cout, Cin);  3x3 -> (9, Cout, Cin) with tap t = ky*3+kx, (dy,dx)=(ky-1,kx-1)
    wk = []
    for layer in layers:
        w_hwio = layer["w_hwio"]
        if layer["ksz"] == 1:
            wk.append(jnp.transpose(w_hwio[0, 0]).astype(jnp.bfloat16))
        else:
            cin_l = w_hwio.shape[2]
            wk.append(jnp.transpose(w_hwio, (0, 1, 3, 2))
                      .reshape(9, out_channel, cin_l).astype(jnp.bfloat16))
    gammas = jnp.stack([l["gamma"] for l in layers]).reshape(5, out_channel, 1)
    betas = jnp.stack([l["beta"] for l in layers]).reshape(5, out_channel, 1)

    kernel = _make_uslayer_kernel(n_img, in_channel, out_channel, ho, wo, roll_like_jnp)

    call = pl.pallas_call(
        kernel,
        out_shape=jax.ShapeDtypeStruct((n_img, out_channel, hwo), jnp.float32),
        in_specs=[_VMEM] * 9,
        out_specs=_VMEM,
        # only scratch: the upsampled (Cin, M) activation slab, bf16 (the im2col patch
        # scratch of the previous version is gone)
        scratch_shapes=[pltpu.VMEM((in_channel, m), jnp.bfloat16)],
        # no vmem_limit_bytes override: footprint (~1.5 MiB) is far under every
        # default scoped limit (v5e 16 MiB, v6e/v7x 32 MiB)
    )

    def forward(x_nchw):
        x_flat = x_nchw.reshape(n_img * in_channel, hw)     # plain reshape of NCHW
        out = call(x_flat, u_op, wk[0], wk[1], wk[2], wk[3], wk[4], gammas, betas)
        return out.reshape(n_img, out_channel, ho, wo)

    return forward, (jnp.asarray(a_h), jnp.asarray(b_w))


# ---------------------------------------------------------------------------
# plain-XLA reference (f32, HIGHEST precision) for the numeric self-check
# ---------------------------------------------------------------------------
def reference_forward(x_nchw, layers, a_h, b_w):
    act = jnp.einsum('ik,jl,nckl->ncij', a_h, b_w, x_nchw,
                     precision=jax.lax.Precision.HIGHEST)        # bilinear upsample
    for layer in layers:
        pad = ((1, 1), (1, 1)) if layer["ksz"] == 3 else ((0, 0), (0, 0))
        y = jax.lax.conv_general_dilated(
            act, layer["w_hwio"], (1, 1), pad,
            dimension_numbers=('NCHW', 'HWIO', 'NCHW'),
            precision=jax.lax.Precision.HIGHEST)
        mean = jnp.mean(y, axis=(0, 2, 3), keepdims=True)
        var = jnp.mean(jnp.square(y - mean), axis=(0, 2, 3), keepdims=True)
        yn = (y - mean) * jax.lax.rsqrt(var + EPS)
        g = layer["gamma"].reshape(1, -1, 1, 1)
        be = layer["beta"].reshape(1, -1, 1, 1)
        act = jnp.maximum(g * yn + be, 0.0)
    return act


if __name__ == "__main__":
    key = jax.random.PRNGKey(0)
    kx, kp = jax.random.split(key)

    n_img, in_channel, out_channel, h, w, scale = 2, 4, 8, 16, 16, 2
    x = jax.random.normal(kx, (n_img, in_channel, h, w), jnp.float32)
    layers = init_params(kp, in_channel, out_channel)

    roll_like_jnp = _probe_roll_matches_jnp()
    forward, (a_h, b_w) = make_uslayer_forward(
        layers, in_channel, out_channel, scale, n_img, h, w, roll_like_jnp)

    out = jax.block_until_ready(jax.jit(forward)(x))

    assert out.shape == (n_img, out_channel, h * scale, w * scale)
    assert bool(jnp.all(jnp.isfinite(out)))
    assert bool(jnp.all(out >= 0.0))          # final ReLU

    # numeric self-check against a plain-XLA f32 implementation of the same module
    # (kernel runs bf16 matmul operands with f32 accumulation -> loose-ish tolerances;
    #  any structural bug (wrong tap shift/mask/weight layout) shows up as O(1) error)
    ref = jax.block_until_ready(
        jax.jit(lambda xx: reference_forward(xx, layers, a_h, b_w))(x))
    diff = out - ref
    max_err = float(jnp.max(jnp.abs(diff)))
    rel_l2 = float(jnp.sqrt(jnp.sum(diff * diff) / jnp.sum(ref * ref)))
    assert max_err < 3e-1 and rel_l2 < 4e-2, (
        f"mismatch vs reference: max abs err {max_err}, rel l2 {rel_l2}")

    print("KERNEL_OK")
</pallas_src>

<mosaic_0001>
module attributes {stable_mosaic.version = 11 : i64} {
  func.func @k(%arg0: memref<8x128xf32, #tpu.memory_space<vmem>>, %arg1: memref<8x128xf32, #tpu.memory_space<vmem>>) attributes {dimension_semantics = [], scalar_prefetch = 0 : i64, scratch_operands = 0 : i64, tpu.core_type = #tpu.core_type<tc>} {
    %c0 = arith.constant 0 : index
    %c0_0 = arith.constant 0 : index
    %0 = vector.load %arg0[%c0, %c0_0] : memref<8x128xf32, #tpu.memory_space<vmem>>, vector<8x128xf32>
    %c1_i32 = arith.constant 1 : i32
    %1 = tpu.dynamic_rotate %0 by %c1_i32 dim 1 : vector<8x128xf32>, i32 -> vector<8x128xf32>
    %c0_1 = arith.constant 0 : index
    %c0_2 = arith.constant 0 : index
    %2 = vector.load %arg1[%c0_1, %c0_2] : memref<8x128xf32, #tpu.memory_space<vmem>>, vector<8x128xf32>
    tpu.vector_store %arg1[%c0_1, %c0_2], %1 {strides = array<i32>} : memref<8x128xf32, #tpu.memory_space<vmem>>, vector<8x128xf32>,
    return
  }
}

</mosaic_0001>

<llo_original>
// kernel: tpu_custom_call.1
$region0: #{tpu_custom_call.1}
  #allocation0 [shape = 'u32[]', space=smem, size = 0x4, offset = 0x4, fixed_abs, tag = 'smem constant byte address 0x4 - core index']
  #allocation1 [shape = 'u32[144,128]{1,0:T(1,128)}', space=vmem, size = 0x12000, scoped, tag = 'internal scratch']
  %s0 = inlined_call_operand.hbm [shape: f32[8,128], index: 0, kind: input, shape index: {}]
  %s1 = inlined_call_operand.hbm [shape: f32[8,128], index: 1, kind: output, shape index: {}]
  %s2 = sld [smem:[#allocation0]]
  $region18: #{tpu_custom_call.1} parent=0
    _
  %s4 = ssub.s32 1, %s2
  %s5 = scalar_select 0, %s4, %s2
  $region1: #{tpu_custom_call.1} parent=0
    #allocation2 [shape = 'u8[4096]{0}', space=vmem, size = 0x1000, scoped, tag = 'input window, operand 0, single buffered']
    #allocation3 [shape = 's32[1]{0}', space=sflag, size = 0x4, scoped, tag = 'scoped memory for tpu_custom_call.1']
    #allocation4 [shape = 's32[1]{0}', space=sflag, size = 0x4, scoped, tag = 'scoped memory for tpu_custom_call.1']
    #allocation5 [shape = 'u8[4096]{0}', space=vmem, size = 0x1000, scoped, tag = 'output window, operand 0, single buffered']
    %6 = vsyncpa [#allocation3], 0
    %7 = vsyncpa [#allocation4], 0
    // Predicated region
    $region2: #{tpu_custom_call.1} parent=1 // pred_check
      _
    $region3: #{tpu_custom_call.1} parent=1 // pred_check_branch
      %9 = sbr.rel (0) target = $region5
    $region4: #{tpu_custom_call.1} parent=1 // pred_region
      %s11 = ssub.s32 128, 128
      %12 = vsyncadd [#allocation3], %s11
      %s14 = sshll.u32 [#allocation2], 4
      %s15 = int_to_ptr.vmem [resolvable:$true] %s14
      %17 = dma.hbm_to_vmem [thread:$0]  %s0, 128, %s15, [#allocation3]
    $region5: #{tpu_custom_call.1} parent=1 // pred_fallthru
      _
    // Predicated region
    $region6: #{tpu_custom_call.1} parent=1 // pred_check
      _
    $region7: #{tpu_custom_call.1} parent=1 // pred_check_branch
      %19 = sbr.rel (0) target = $region9
    $region8: #{tpu_custom_call.1} parent=1 // pred_region
      %20 = dma.done [#allocation3], 128
    $region9: #{tpu_custom_call.1} parent=1 // pred_fallthru
      _
    %v21 = vld [vmem:[#allocation2] sm:$0xff]
    %22 = vrot.lane.b32.xlu0 %v21, 1
    %v23 = vpop.permute.xlu0 %22
    %24 = vst [vmem:[#allocation5] sm:$0xff] %v23
    // Predicated region
    $region10: #{tpu_custom_call.1} parent=1 // pred_check
      _
    $region11: #{tpu_custom_call.1} parent=1 // pred_check_branch
      %26 = sbr.rel (0) target = $region13
    $region12: #{tpu_custom_call.1} parent=1 // pred_region
      %s28 = ssub.s32 128, 128
      %29 = vsyncadd [#allocation4], %s28
      %s31 = sshll.u32 [#allocation5], 4
      %s32 = int_to_ptr.vmem [resolvable:$true] %s31
      %34 = dma.vmem_to_hbm [thread:$0]  %s32, 128, %s1, [#allocation4]
    $region13: #{tpu_custom_call.1} parent=1 // pred_fallthru
      _
    // Predicated region
    $region14: #{tpu_custom_call.1} parent=1 // pred_check
      _
    $region15: #{tpu_custom_call.1} parent=1 // pred_check_branch
      %36 = sbr.rel (0) target = $region17
    $region16: #{tpu_custom_call.1} parent=1 // pred_region
      %37 = dma.done [#allocation4], 128
    $region17: #{tpu_custom_call.1} parent=1 // pred_fallthru
      _
    %38 = vsyncpa [#allocation3], 1
    %39 = vsyncpa [#allocation4], 1

</llo_original>
